<compile_context>
chip_gen: v7x
topology: tpu7x:2x2x1
jax: 0.10.0
libtpu: 0.0.40
codegen_flags: <defaults>
</compile_context>

<pallas_src>
import functools

import numpy as np
import jax
import jax.numpy as jnp
from jax.experimental import pallas as pl
from jax.experimental.pallas import tpu as pltpu

_IMAGENET_MEAN = (0.485, 0.456, 0.406)
_IMAGENET_STD = (0.229, 0.224, 0.225)
_IMAGENET_INV_STD = tuple(1.0 / s for s in _IMAGENET_STD)
_C = 3


# ---------------------------------------------------------------------------
# Pallas kernels
# ---------------------------------------------------------------------------
def _normalize_kernel(x_ref, o_ref):
    # x_ref / o_ref: (1, 3, tile_h, W); grid = (N, H // tile_h)
    for c in range(_C):
        o_ref[0, c] = ((x_ref[0, c] - _IMAGENET_MEAN[c])
                       * _IMAGENET_INV_STD[c]).astype(o_ref.dtype)


def _resize_normalize_kernel(rh_ref, rwt_ref, x_ref, o_ref, acc_ref):
    # rh_ref : (1, S, tile_h)    bf16  chunk k of the row-resize matrix Rh
    # rwt_ref: (W, S)            bf16  resident Rw^T
    # x_ref  : (1, 3, tile_h, W) f32   chunk k of the input plane stack
    # o_ref  : (1, 3, S, S)      f32   resident across the k (reduction) axis
    # acc_ref: (3, S, W)         f32   VMEM scratch accumulator
    k = pl.program_id(1)

    @pl.when(k == 0)
    def _():
        acc_ref[...] = jnp.zeros_like(acc_ref)

    rh = rh_ref[0]                                           # (S, tile_h)
    for c in range(_C):
        x_c = x_ref[0, c].astype(jnp.bfloat16)               # (tile_h, W)
        acc_ref[c] += jnp.dot(rh, x_c, preferred_element_type=jnp.float32)

    @pl.when(k == pl.num_programs(1) - 1)
    def _():
        rwt = rwt_ref[...]                                   # (W, S)
        for c in range(_C):
            y = jnp.dot(acc_ref[c].astype(jnp.bfloat16), rwt,
                        preferred_element_type=jnp.float32)  # (S, S)
            o_ref[0, c] = ((y - _IMAGENET_MEAN[c])
                           * _IMAGENET_INV_STD[c]).astype(o_ref.dtype)


# ---------------------------------------------------------------------------
# Host-side helpers
# ---------------------------------------------------------------------------
@functools.lru_cache(maxsize=None)
def _bilinear_resize_matrix_np(out_size: int, in_size: int) -> np.ndarray:
    """R (out, in) with y = R @ x == bilinear resize along axis 0
    (PyTorch F.interpolate, align_corners=False, no antialias)."""
    scale = in_size / out_size
    dst = np.arange(out_size, dtype=np.float64)
    src = np.maximum((dst + 0.5) * scale - 0.5, 0.0)
    i0 = np.clip(np.floor(src).astype(np.int64), 0, in_size - 1)
    i1 = np.minimum(i0 + 1, in_size - 1)
    w = src - i0
    r = np.zeros((out_size, in_size), dtype=np.float64)
    r[np.arange(out_size), i0] += 1.0 - w
    r[np.arange(out_size), i1] += w
    return r.astype(np.float32)


def _choose_tile_h(h: int, w: int, itemsize: int = 4,
                   target_bytes: int = 2 * 1024 * 1024) -> int:
    """Largest multiple-of-8 divisor of h whose (3, tile_h, w) block fits the
    budget; falls back to full h when h is not divisible by 8."""
    if h <= 8 or h % 8 != 0:
        return h
    divisors = [t for t in range(8, h + 1, 8) if h % t == 0]
    fitting = [t for t in divisors if _C * t * w * itemsize <= target_bytes]
    return max(fitting) if fitting else min(divisors)


# ---------------------------------------------------------------------------
# Wrapper (equivalent of the nn.Module forward)
# ---------------------------------------------------------------------------
class PrepareDataPretrained:
    """Resize (optional, bilinear SxS) + ImageNet normalize via Pallas TPU."""

    # TODO(synk): torchvision transforms.Resize defaults to antialias=True for
    # bilinear downscaling; this implements F.interpolate-style bilinear
    # (align_corners=False, no antialias), i.e. Resize(..., antialias=False).

    def __init__(self, model_size=None, max_block_bytes=2 * 1024 * 1024):
        self.model_size = None if model_size is None else int(model_size)
        self.max_block_bytes = int(max_block_bytes)

    def __call__(self, x):
        return self.forward(x)

    def forward(self, x):
        n, c, h, w = x.shape
        assert c == _C, "Normalize(mean/std) expects 3 channels"
        x = x.astype(jnp.float32)
        if self.model_size is None:
            return self._normalize(x, n, h, w)
        return self._resize_normalize(x, n, h, w, self.model_size)

    # -- normalize only -----------------------------------------------------
    def _normalize(self, x, n, h, w):
        tile_h = _choose_tile_h(h, w, 4, self.max_block_bytes)
        n_h = h // tile_h
        blk = (1, _C, tile_h, w)
        idx = lambda i, j: (i, 0, j, 0)
        block_bytes = _C * tile_h * w * 4
        vmem_limit = min(64 << 20, max(32 << 20, int(4 * block_bytes * 1.5)))
        return pl.pallas_call(
            _normalize_kernel,
            out_shape=jax.ShapeDtypeStruct((n, _C, h, w), jnp.float32),
            grid=(n, n_h),
            in_specs=[pl.BlockSpec(blk, idx)],
            out_specs=pl.BlockSpec(blk, idx),
            compiler_params=pltpu.CompilerParams(
                dimension_semantics=("parallel", "parallel"),
                vmem_limit_bytes=vmem_limit),
        )(x)

    # -- resize + normalize --------------------------------------------------
    def _resize_normalize(self, x, n, h, w, s):
        tile_h = _choose_tile_h(h, w, 4, self.max_block_bytes)
        n_h = h // tile_h

        rh_np = _bilinear_resize_matrix_np(s, h)                 # (S, H)
        rw_np = _bilinear_resize_matrix_np(s, w)                 # (S, W)
        # Pre-chunk Rh -> (n_h, S, tile_h): each chunk's last dim is a full
        # array dim, so no 128-divisibility constraint applies.
        rh_chunks = np.ascontiguousarray(
            rh_np.reshape(s, n_h, tile_h).transpose(1, 0, 2))
        rh = jnp.asarray(rh_chunks, dtype=jnp.bfloat16)          # (n_h, S, th)
        rwt = jnp.asarray(rw_np.T, dtype=jnp.bfloat16)           # (W, S)

        x_bytes = _C * tile_h * w * 4
        o_bytes = _C * s * s * 4
        acc_bytes = _C * s * w * 4
        rh_bytes = s * tile_h * 2
        rwt_bytes = w * s * 2
        est = 2 * (x_bytes + o_bytes + rh_bytes + rwt_bytes) + acc_bytes
        vmem_limit = min(64 << 20, max(32 << 20, int(est * 1.5)))

        return pl.pallas_call(
            _resize_normalize_kernel,
            out_shape=jax.ShapeDtypeStruct((n, _C, s, s), jnp.float32),
            grid=(n, n_h),
            in_specs=[
                pl.BlockSpec((1, s, tile_h), lambda i, k: (k, 0, 0)),      # Rh chunk
                pl.BlockSpec((w, s), lambda i, k: (0, 0)),                 # Rw^T
                pl.BlockSpec((1, _C, tile_h, w), lambda i, k: (i, 0, k, 0)),
            ],
            out_specs=pl.BlockSpec((1, _C, s, s), lambda i, k: (i, 0, 0, 0)),
            scratch_shapes=[pltpu.VMEM((_C, s, w), jnp.float32)],
            compiler_params=pltpu.CompilerParams(
                dimension_semantics=("parallel", "arbitrary"),
                vmem_limit_bytes=vmem_limit),
        )(rh, rwt, x)


# ---------------------------------------------------------------------------
# Pure-JAX references for validation
# ---------------------------------------------------------------------------
def _ref_normalize(x):
    mean = jnp.asarray(_IMAGENET_MEAN, jnp.float32)[None, :, None, None]
    istd = jnp.asarray(_IMAGENET_INV_STD, jnp.float32)[None, :, None, None]
    return (x - mean) * istd


def _ref_resize_normalize_bf16(x, s):
    # Mirrors the kernel math: bf16 operands, f32 accumulation.
    _, _, h, w = x.shape
    rh = jnp.asarray(_bilinear_resize_matrix_np(s, h), jnp.bfloat16)
    rw = jnp.asarray(_bilinear_resize_matrix_np(s, w), jnp.bfloat16)
    xb = x.astype(jnp.bfloat16)
    t = jnp.einsum('sh,nchw->ncsw', rh, xb, preferred_element_type=jnp.float32)
    y = jnp.einsum('ncsw,tw->ncst', t.astype(jnp.bfloat16), rw,
                   preferred_element_type=jnp.float32)
    return _ref_normalize(y)


def _ref_resize_normalize_f32(x, s):
    _, _, h, w = x.shape
    rh = jnp.asarray(_bilinear_resize_matrix_np(s, h))
    rw = jnp.asarray(_bilinear_resize_matrix_np(s, w))
    y = jnp.einsum('sh,nchw,tw->ncst', rh, x, rw)
    return _ref_normalize(y)


if __name__ == "__main__":
    key = jax.random.PRNGKey(0)
    k1, k2 = jax.random.split(key)

    # 1) Default module: model_size=None -> normalize only (exact f32 math).
    x = jax.random.uniform(k1, (2, 3, 16, 16), dtype=jnp.float32)
    out = jax.block_until_ready(PrepareDataPretrained(model_size=None)(x))
    assert out.shape == (2, 3, 16, 16)
    assert jnp.allclose(out, _ref_normalize(x), atol=1e-5, rtol=1e-5)

    # 2) Resize 16 -> 8 + normalize (single H chunk, bf16 MXU path).
    out_rs = jax.block_until_ready(PrepareDataPretrained(model_size=8)(x))
    assert out_rs.shape == (2, 3, 8, 8)
    assert jnp.allclose(out_rs, _ref_resize_normalize_bf16(x, 8),
                        atol=1e-2, rtol=1e-2)
    assert jnp.allclose(out_rs, _ref_resize_normalize_f32(x, 8),
                        atol=5e-2, rtol=5e-2)

    # 3) Force a tiny block budget to exercise the multi-chunk H-accumulation
    #    path (tile_h = 8 -> 4 chunks per image).
    x2 = jax.random.uniform(k2, (2, 3, 32, 32), dtype=jnp.float32)
    mod_chunked = PrepareDataPretrained(model_size=8, max_block_bytes=4096)
    out_ck = jax.block_until_ready(mod_chunked(x2))
    assert out_ck.shape == (2, 3, 8, 8)
    assert jnp.allclose(out_ck, _ref_resize_normalize_bf16(x2, 8),
                        atol=1e-2, rtol=1e-2)

    print("KERNEL_OK")
</pallas_src>

<mosaic_0001>
module attributes {stable_mosaic.version = 11 : i64} {
  func.func @_normalize_kernel(%arg0: i32, %arg1: i32, %arg2: memref<1x3x16x16xf32, #tpu.memory_space<vmem>>, %arg3: memref<1x3x16x16xf32, #tpu.memory_space<vmem>>) attributes {dimension_semantics = [#tpu.dimension_semantics<parallel>, #tpu.dimension_semantics<parallel>], iteration_bounds = array<i64: 2, 1>, scalar_prefetch = 0 : i64, scratch_operands = 0 : i64, tpu.core_type = #tpu.core_type<tc>, window_params = [{transform_indices = @transform_0, window_bounds = array<i64: 1, 3, 16, 16>}, {transform_indices = @transform_1, window_bounds = array<i64: 1, 3, 16, 16>}]} {
    %c0 = arith.constant 0 : index
    %c0_0 = arith.constant 0 : index
    %c0_1 = arith.constant 0 : index
    %c0_2 = arith.constant 0 : index
    %0 = vector.load %arg2[%c0, %c0_0, %c0_1, %c0_2] : memref<1x3x16x16xf32, #tpu.memory_space<vmem>>, vector<1x1x16x16xf32>
    %1 = vector.shape_cast %0 : vector<1x1x16x16xf32> to vector<16x16xf32>
    %cst = arith.constant 4.850000e-01 : f32
    %2 = vector.broadcast %cst : f32 to vector<16x16xf32>
    %3 = arith.subf %1, %2 : vector<16x16xf32>
    %cst_3 = arith.constant 4.36681223 : f32
    %4 = vector.broadcast %cst_3 : f32 to vector<16x16xf32>
    %5 = arith.mulf %3, %4 : vector<16x16xf32>
    %c0_4 = arith.constant 0 : index
    %c0_5 = arith.constant 0 : index
    %c0_6 = arith.constant 0 : index
    %c0_7 = arith.constant 0 : index
    %6 = vector.load %arg3[%c0_4, %c0_5, %c0_6, %c0_7] : memref<1x3x16x16xf32, #tpu.memory_space<vmem>>, vector<1x1x16x16xf32>
    %7 = vector.shape_cast %6 : vector<1x1x16x16xf32> to vector<16x16xf32>
    %8 = vector.shape_cast %5 : vector<16x16xf32> to vector<1x1x16x16xf32>
    tpu.vector_store %arg3[%c0_4, %c0_5, %c0_6, %c0_7], %8 {strides = array<i32>} : memref<1x3x16x16xf32, #tpu.memory_space<vmem>>, vector<1x1x16x16xf32>,
    %c0_8 = arith.constant 0 : index
    %c1 = arith.constant 1 : index
    %c0_9 = arith.constant 0 : index
    %c0_10 = arith.constant 0 : index
    %9 = vector.load %arg2[%c0_8, %c1, %c0_9, %c0_10] : memref<1x3x16x16xf32, #tpu.memory_space<vmem>>, vector<1x1x16x16xf32>
    %10 = vector.shape_cast %9 : vector<1x1x16x16xf32> to vector<16x16xf32>
    %cst_11 = arith.constant 4.560000e-01 : f32
    %11 = vector.broadcast %cst_11 : f32 to vector<16x16xf32>
    %12 = arith.subf %10, %11 : vector<16x16xf32>
    %cst_12 = arith.constant 4.46428585 : f32
    %13 = vector.broadcast %cst_12 : f32 to vector<16x16xf32>
    %14 = arith.mulf %12, %13 : vector<16x16xf32>
    %c0_13 = arith.constant 0 : index
    %c1_14 = arith.constant 1 : index
    %c0_15 = arith.constant 0 : index
    %c0_16 = arith.constant 0 : index
    %15 = vector.load %arg3[%c0_13, %c1_14, %c0_15, %c0_16] : memref<1x3x16x16xf32, #tpu.memory_space<vmem>>, vector<1x1x16x16xf32>
    %16 = vector.shape_cast %15 : vector<1x1x16x16xf32> to vector<16x16xf32>
    %17 = vector.shape_cast %14 : vector<16x16xf32> to vector<1x1x16x16xf32>
    tpu.vector_store %arg3[%c0_13, %c1_14, %c0_15, %c0_16], %17 {strides = array<i32>} : memref<1x3x16x16xf32, #tpu.memory_space<vmem>>, vector<1x1x16x16xf32>,
    %c0_17 = arith.constant 0 : index
    %c2 = arith.constant 2 : index
    %c0_18 = arith.constant 0 : index
    %c0_19 = arith.constant 0 : index
    %18 = vector.load %arg2[%c0_17, %c2, %c0_18, %c0_19] : memref<1x3x16x16xf32, #tpu.memory_space<vmem>>, vector<1x1x16x16xf32>
    %19 = vector.shape_cast %18 : vector<1x1x16x16xf32> to vector<16x16xf32>
    %cst_20 = arith.constant 4.060000e-01 : f32
    %20 = vector.broadcast %cst_20 : f32 to vector<16x16xf32>
    %21 = arith.subf %19, %20 : vector<16x16xf32>
    %cst_21 = arith.constant 4.44444466 : f32
    %22 = vector.broadcast %cst_21 : f32 to vector<16x16xf32>
    %23 = arith.mulf %21, %22 : vector<16x16xf32>
    %c0_22 = arith.constant 0 : index
    %c2_23 = arith.constant 2 : index
    %c0_24 = arith.constant 0 : index
    %c0_25 = arith.constant 0 : index
    %24 = vector.load %arg3[%c0_22, %c2_23, %c0_24, %c0_25] : memref<1x3x16x16xf32, #tpu.memory_space<vmem>>, vector<1x1x16x16xf32>
    %25 = vector.shape_cast %24 : vector<1x1x16x16xf32> to vector<16x16xf32>
    %26 = vector.shape_cast %23 : vector<16x16xf32> to vector<1x1x16x16xf32>
    tpu.vector_store %arg3[%c0_22, %c2_23, %c0_24, %c0_25], %26 {strides = array<i32>} : memref<1x3x16x16xf32, #tpu.memory_space<vmem>>, vector<1x1x16x16xf32>,
    return
  }
  func.func @transform_0(%arg0: i32, %arg1: i32) -> (i32, i32, i32, i32) {
    %c0_i32 = arith.constant 0 : i32
    %c0_i32_0 = arith.constant 0 : i32
    %c0_i32_1 = arith.constant 0 : i32
    return %arg0, %c0_i32, %arg1, %c0_i32_0 : i32, i32, i32, i32
  }
  func.func @transform_1(%arg0: i32, %arg1: i32) -> (i32, i32, i32, i32) {
    %c0_i32 = arith.constant 0 : i32
    %c0_i32_0 = arith.constant 0 : i32
    %c0_i32_1 = arith.constant 0 : i32
    return %arg0, %c0_i32, %arg1, %c0_i32_0 : i32, i32, i32, i32
  }
}

</mosaic_0001>

<llo_original>
// kernel: tpu_custom_call.1
$region0: #{tpu_custom_call.1}
  #allocation0 [shape = 'u32[]', space=smem, size = 0x4, offset = 0x4, fixed_abs, tag = 'smem constant byte address 0x4 - core index']
  #allocation1 [shape = 'u32[144,128]{1,0:T(1,128)}', space=vmem, size = 0x12000, scoped, tag = 'internal scratch']
  %s0 = inlined_call_operand.hbm [shape: f32[2,3,16,16], index: 0, kind: input, shape index: {}]
  %s1 = inlined_call_operand.hbm [shape: f32[2,3,16,16], index: 1, kind: output, shape index: {}]
  %s2 = sld [smem:[#allocation0]]
  $region41: #{tpu_custom_call.1} parent=0
    _
  %s4 = ssub.s32 1, %s2
  %s5 = scalar_select 0, %s4, %s2
  $region1: #{tpu_custom_call.1} parent=0
    #allocation2 [shape = 'u8[49152]{0}', space=vmem, size = 0xc000, scoped, tag = 'input window, operand 0']
    #allocation3 [shape = 's32[2]{0}', space=sflag, size = 0x8, scoped, tag = 'scoped memory for tpu_custom_call.1']
    #allocation4 [shape = 's32[2]{0}', space=sflag, size = 0x8, scoped, tag = 'scoped memory for tpu_custom_call.1']
    #allocation5 [shape = 'u8[49152]{0}', space=vmem, size = 0xc000, scoped, tag = 'output window, operand 0']
    %6 = vsyncpa [#allocation3], 0
    %s7 = scalar_lea.sflag [#allocation3], 1
    %8 = vsyncpa %s7, 0
    %9 = vsyncpa [#allocation4], 0
    %s10 = scalar_lea.sflag [#allocation4], 1
    %11 = vsyncpa %s10, 0
    loop: start=0, step=1, limit=4
    $region2: #{tpu_custom_call.1} parent=1 // loop_pre_header
      _
    $region3: #{tpu_custom_call.1} parent=1 // loop_header
      %s13 = sphi 0, %s17
      %p14 = scmp.ge.s32.totalorder %s13, 4
      %s20 = sphi 0, %s32
      %s21 = sphi 0, %s28
      %s22 = sphi 0, %s20
      %s23 = sphi 0, %s21
      %s24 = sphi 0, %s22
      %s25 = sphi 0, %s23
      %s37 = sphi 0, %s39
      %s40 = sphi 0, %s37
      %s41 = sphi 0, %s40
      %s57 = sphi 0, %s41
      %s65 = sphi 0, %s67
      %s68 = sphi 0, %s65
      %s69 = sphi 0, %s68
      %s85 = sphi 0, %s69
    $region4: #{tpu_custom_call.1} parent=1 // loop_header_branch
      %16 = sbr.rel (%p14) target = $region8
    $region5: #{tpu_custom_call.1} parent=1 // loop_body
      %s18 = ssub.s32 %s13, 1
      %s19 = ssub.s32 %s13, 2
      %s26 = sadd.s32 1, %s21
      %p27 = scmp.ge.s32.totalorder %s26, 1
      %s28 = scalar_select %p27, 0, %s26
      %s29 = sadd.s32 1, %s20
      %s30 = scalar_select %p27, %s29, %s20
      %p31 = scmp.ge.s32.totalorder %s30, 2
      %s32 = scalar_select %p31, 0, %s30
      %s33 = ssub.s32 %s20, %s32
      %s34 = ssub.s32 %s21, %s28
      %s35 = sor.u32 %s33, %s34
      %p36 = scmp.eq.s32.totalorder %s35, 0
      %s38 = sadd.s32 %s37, 1
      %s39 = scalar_select %p36, %s37, %s38
      %p42 = pneg %p36
      %p43 = scmp.eq.s32.totalorder %s13, 1
      %p44 = por %p42, %p43
      %p45 = scmp.ne.s32.totalorder %s37, %s40
      %p46 = scmp.eq.s32.totalorder %s13, 0
      %p47 = por %p45, %p46
      %p48 = scmp.ne.s32.totalorder %s37, %s40
      %p49 = scmp.eq.s32.totalorder %s18, 1
      %p50 = por %p48, %p49
      %p51 = scmp.ne.s32.totalorder %s40, %s41
      %p52 = scmp.eq.s32.totalorder %s18, 0
      %p53 = por %p51, %p52
      %p54 = scmp.ne.s32.totalorder %s40, %s41
      %p55 = scmp.eq.s32.totalorder %s19, 1
      %p56 = por %p54, %p55
      %p58 = scmp.ne.s32.totalorder %s41, %s57
      %p59 = scmp.eq.s32.totalorder %s19, 0
      %p60 = por %p58, %p59
      %s61 = ssub.s32 %s20, %s32
      %s62 = ssub.s32 %s21, %s28
      %s63 = sor.u32 %s61, %s62
      %p64 = scmp.eq.s32.totalorder %s63, 0
      %s66 = sadd.s32 %s65, 1
      %s67 = scalar_select %p64, %s65, %s66
      %p70 = pneg %p64
      %p71 = scmp.eq.s32.totalorder %s13, 1
      %p72 = por %p70, %p71
      %p73 = scmp.ne.s32.totalorder %s65, %s68
      %p74 = scmp.eq.s32.totalorder %s13, 0
      %p75 = por %p73, %p74
      %p76 = scmp.ne.s32.totalorder %s65, %s68
      %p77 = scmp.eq.s32.totalorder %s18, 1
      %p78 = por %p76, %p77
      %p79 = scmp.ne.s32.totalorder %s68, %s69
      %p80 = scmp.eq.s32.totalorder %s18, 0
      %p81 = por %p79, %p80
      %p82 = scmp.ne.s32.totalorder %s68, %s69
      %p83 = scmp.eq.s32.totalorder %s19, 1
      %p84 = por %p82, %p83
      %p86 = scmp.ne.s32.totalorder %s69, %s85
      %p87 = scmp.eq.s32.totalorder %s19, 0
      %p88 = por %p86, %p87
      %p89 = scmp.le.s32.totalorder 1, %s13
      %p90 = scmp.lt.s32.totalorder %s13, 3
      %p91 = pnand %p89, %p90
      %p92 = pneg %p91
      // Predicated region
      $region9: #{tpu_custom_call.1} parent=5 // pred_check
        _
      $region10: #{tpu_custom_call.1} parent=5 // pred_check_branch
        %94 = sbr.rel (%p91) target = $region12
      $region11: #{tpu_custom_call.1} parent=5 // pred_region
        %s95 = ssub.s32 %s13, 1
      $region12: #{tpu_custom_call.1} parent=5 // pred_fallthru
        _
      %p96 = scmp.lt.s32.totalorder %s13, 2
      // Predicated region
      $region13: #{tpu_custom_call.1} parent=5 // pred_check
        %p97 = pneg %p96
      $region14: #{tpu_custom_call.1} parent=5 // pred_check_branch
        %99 = sbr.rel (%p97) target = $region16
      $region15: #{tpu_custom_call.1} parent=5 // pred_region
        // Predicated region
        $region17: #{tpu_custom_call.1} parent=15 // pred_check
          %p100 = pneg %p47
        $region18: #{tpu_custom_call.1} parent=15 // pred_check_branch
          %102 = sbr.rel (%p100) target = $region20
        $region19: #{tpu_custom_call.1} parent=15 // pred_region
          %s103 = sand.u32 %s37, 1
          %s104 = scalar_lea.sflag [#allocation3], %s103
          %s105 = sand.u32 %s37, 1
          %s106 = smul.addr %s105, 48
          %s107 = scalar_lea.vmem [#allocation2], %s106
          %s108 = smul.u32 2, %s21
          %s110 = ssub.s32 768, 768
          %111 = vsyncadd %s104, %s110
          %s112 = smul.addr %s20, 6
          %s113 = sadd.s32 %s108, %s112
          %s114 = smul.addr %s113, 128
          %s115 = scalar_lea.hbm %s0, %s114
          %s116 = sshll.u32 %s107, 4
          %s117 = int_to_ptr.vmem [resolvable:$true] %s116
          %122 = dma.hbm_to_vmem [thread:$0]  %s115, 768, %s117, %s104, 128, 128, 8
        $region20: #{tpu_custom_call.1} parent=15 // pred_fallthru
          _
      $region16: #{tpu_custom_call.1} parent=5 // pred_fallthru
        _
      %p123 = scmp.le.s32.totalorder 1, %s13
      %p124 = scmp.lt.s32.totalorder %s13, 3
      %p125 = pnand %p123, %p124
      %p126 = pneg %p125
      // Predicated region
      $region21: #{tpu_custom_call.1} parent=5 // pred_check
        _
      $region22: #{tpu_custom_call.1} parent=5 // pred_check_branch
        %128 = sbr.rel (%p125) target = $region24
      $region23: #{tpu_custom_call.1} parent=5 // pred_region
        %s129 = ssub.s32 %s13, 1
        %s130 = sand.u32 %s40, 1
        %s131 = scalar_lea.sflag [#allocation3], %s130
        %s132 = sand.u32 %s40, 1
        %s133 = smul.addr %s132, 48
        %s134 = scalar_lea.vmem [#allocation2], %s133
        // Predicated region
        $region25: #{tpu_custom_call.1} parent=23 // pred_check
          %p135 = pneg %p53
        $region26: #{tpu_custom_call.1} parent=23 // pred_check_branch
          %137 = sbr.rel (%p135) target = $region28
        $region27: #{tpu_custom_call.1} parent=23 // pred_region
          %138 = dma.done %s131, 768
        $region28: #{tpu_custom_call.1} parent=23 // pred_fallthru
          _
        %s139 = sand.u32 %s40, 1
        %s140 = scalar_lea.sflag [#allocation3], %s139
        %s141 = sand.u32 %s40, 1
        %s142 = smul.addr %s141, 48
        %s143 = scalar_lea.vmem [#allocation2], %s142
        %p144 = pneg %p53
        %p145 = pneg %p50
        %p146 = pneg %p81
        %p147 = pneg %p78
        %s148 = sand.u32 %s68, 1
        %s149 = scalar_lea.sflag [#allocation4], %s148
        %s150 = sand.u32 %s68, 1
        %s151 = smul.addr %s150, 48
        %s152 = scalar_lea.vmem [#allocation5], %s151
        %s153 = smul.u32 2, %s23
        %s154 = smul.u32 2, %s23
        %v155 = vld [vmem:[%s134] sm:$0xff]
        %v156 = vld [vmem:[%s134 + $0x8] sm:$0xff]
        %v157 = vsub.f32 %v155, 0.485
        %v158 = vsub.f32 %v156, 0.485
        %v159 = vmul.f32 %v157, 4.366812
        %v160 = vmul.f32 %v158, 4.366812
        %vm161 = vcmask 130048
        %162 = vst.msk [vmem:[%s152] sm:$0xff] %vm161, %v159
        %163 = vst.msk [vmem:[%s152 + $0x8] sm:$0xff] %vm161, %v160
        %s164 = scalar_lea.vmem %s134, 16 [#allocation2]
        %v165 = vld [vmem:[%s164] sm:$0xff]
        %v166 = vld [vmem:[%s164 + $0x8] sm:$0xff]
        %v167 = vsub.f32 %v165, 0.456
        %v168 = vsub.f32 %v166, 0.456
        %v169 = vmul.f32 %v167, 4.464286
        %v170 = vmul.f32 %v168, 4.464286
        %s171 = scalar_lea.vmem %s152, 16 [#allocation5]
        %172 = vst.msk [vmem:[%s171] sm:$0xff] %vm161, %v169
        %173 = vst.msk [vmem:[%s171 + $0x8] sm:$0xff] %vm161, %v170
        %s174 = scalar_lea.vmem %s134, 32 [#allocation2]
        %v175 = vld [vmem:[%s174] sm:$0xff]
        %v176 = vld [vmem:[%s174 + $0x8] sm:$0xff]
        %v177 = vsub.f32 %v175, 0.406
        %v178 = vsub.f32 %v176, 0.406
        %v179 = vmul.f32 %v177, 4.4444447
        %v180 = vmul.f32 %v178, 4.4444447
        %s181 = scalar_lea.vmem %s152, 32 [#allocation5]
        %182 = vst.msk [vmem:[%s181] sm:$0xff] %vm161, %v179
        %183 = vst.msk [vmem:[%s181 + $0x8] sm:$0xff] %vm161, %v180
        %s184 = sand.u32 %s68, 1
        %s185 = scalar_lea.sflag [#allocation4], %s184
        %s186 = sand.u32 %s68, 1
        %s187 = smul.addr %s186, 48
        %s188 = scalar_lea.vmem [#allocation5], %s187
        // Predicated region
        $region29: #{tpu_custom_call.1} parent=23 // pred_check
          %p189 = pneg %p78
        $region30: #{tpu_custom_call.1} parent=23 // pred_check_branch
          %191 = sbr.rel (%p189) target = $region32
        $region31: #{tpu_custom_call.1} parent=23 // pred_region
          %s192 = smul.u32 2, %s23
          %s194 = ssub.s32 768, 768
          %195 = vsyncadd %s185, %s194
          %s196 = smul.addr %s22, 6
          %s197 = sadd.s32 %s192, %s196
          %s198 = smul.addr %s197, 128
          %s199 = scalar_lea.hbm %s1, %s198
          %s200 = sshll.u32 %s188, 4
          %s201 = int_to_ptr.vmem [resolvable:$true] %s200
          %206 = dma.vmem_to_hbm [thread:$0]  %s201, 768, %s199, %s185, 128, 128, 8
        $region32: #{tpu_custom_call.1} parent=23 // pred_fallthru
          _
      $region24: #{tpu_custom_call.1} parent=5 // pred_fallthru
        _
      %p207 = scmp.le.s32.totalorder 2, %s13
      // Predicated region
      $region33: #{tpu_custom_call.1} parent=5 // pred_check
        %p208 = pneg %p207
      $region34: #{tpu_custom_call.1} parent=5 // pred_check_branch
        %210 = sbr.rel (%p208) target = $region36
      $region35: #{tpu_custom_call.1} parent=5 // pred_region
        %s211 = ssub.s32 %s13, 2
        // Predicated region
        $region37: #{tpu_custom_call.1} parent=35 // pred_check
          %p212 = pneg %p84
        $region38: #{tpu_custom_call.1} parent=35 // pred_check_branch
          %214 = sbr.rel (%p212) target = $region40
        $region39: #{tpu_custom_call.1} parent=35 // pred_region
          %s215 = sand.u32 %s69, 1
          %s216 = scalar_lea.sflag [#allocation4], %s215
          %s217 = sand.u32 %s69, 1
          %s218 = smul.addr %s217, 48
          %s219 = scalar_lea.vmem [#allocation5], %s218
          %220 = dma.done %s216, 768
        $region40: #{tpu_custom_call.1} parent=35 // pred_fallthru
          _
      $region36: #{tpu_custom_call.1} parent=5 // pred_fallthru
        _
    $region6: #{tpu_custom_call.1} parent=1 // loop_footer
      %s17 = sadd.s32 1, %s13
    $region7: #{tpu_custom_call.1} parent=1 // loop_footer_branch
      %12 = sbr.rel target = $region3
    $region8: #{tpu_custom_call.1} parent=1 // loop_exit
      _
    %221 = vsyncpa [#allocation3], 1
    %s222 = scalar_lea.sflag [#allocation3], 1
    %223 = vsyncpa %s222, 1
    %224 = vsyncpa [#allocation4], 1
    %s225 = scalar_lea.sflag [#allocation4], 1
    %226 = vsyncpa %s225, 1

</llo_original>
